<compile_context>
chip_gen: v6e
topology: v6e:2x2x1
jax: 0.10.0
libtpu: 0.0.40
codegen_flags: <defaults>
</compile_context>

<pallas_src>
import jax
import jax.numpy as jnp
from jax.experimental import pallas as pl
from jax.experimental.pallas import tpu as pltpu


def _cdiv(a, b):
    return -(-a // b)


def _mass_conservation_kernel(nodes_ref, src_ref, dst_ref, val_ref,
                              out_ref, acc_ref):
    """One (parallel-half, edge-tile) grid step."""
    i = pl.program_id(1)                       # edge-tile index inside this half

    @pl.when(i == 0)
    def _init():
        acc_ref[...] = jnp.zeros_like(acc_ref)

    k_pad = nodes_ref.shape[0]
    tn = src_ref.shape[1]

    # Hoist the (1, TN) -> (8, TN) sublane broadcasts out of the node-group
    # loop (JAX does not CSE broadcast_in_dim; doing it inside the loop would
    # replicate the broadcast per group).
    src_b = jnp.broadcast_to(src_ref[...], (8, tn))      # int32
    dst_b = jnp.broadcast_to(dst_ref[...], (8, tn))      # int32
    val_b = jnp.broadcast_to(val_ref[...], (8, tn))      # f32

    # Per-(node, edge) net contribution: +val where the edge leaves the node,
    # -val where it enters.  Pure VPU compare + select; folding node groups
    # into one running (8, TN) slab keeps acc traffic independent of K_pad.
    partial = acc_ref[...]                               # (8, TN) f32
    for g in range(k_pad // 8):                          # small, static unroll
        nodes_g = nodes_ref[pl.ds(g * 8, 8), :]          # (8, 1) int32
        partial = (partial
                   + jnp.where(src_b == nodes_g, val_b, 0.0)
                   - jnp.where(dst_b == nodes_g, val_b, 0.0))
    acc_ref[...] = partial

    @pl.when(i == pl.num_programs(1) - 1)
    def _finalize():
        total = jnp.sum(acc_ref[...])          # single cross-lane/sublane reduce
        out_ref[...] = jnp.full(out_ref.shape, total, dtype=out_ref.dtype)


def mass_conservation_loss(flow, *, tn=512):
    """Pallas TPU implementation of Mass_conservation_loss.forward."""
    flow = jnp.asarray(flow, jnp.float32)
    n = int(flow.shape[0])

    # int32 ids (float equality on ids is fragile; the dict-keyed reference
    # implies integer-valued node ids).
    src_i = flow[:, 0].astype(jnp.int32)
    dst_i = flow[:, 1].astype(jnp.int32)
    val = flow[:, 2]

    # Host-side glue mirroring torch.unique(flow[:, :-1]).  Data-dependent
    # size, so resolved eagerly; K is padded to a multiple of 8 (bucket K to
    # fixed sizes in production to limit recompiles).
    nodes = jnp.unique(jnp.concatenate([src_i, dst_i]))
    k = int(nodes.shape[0])
    k_pad = max(8, _cdiv(k, 8) * 8)
    node_sentinel = int(nodes.min()) - 1       # never equals a real edge id
    nodes_p = jnp.pad(nodes, (0, k_pad - k), constant_values=node_sentinel)

    # Pad the edge axis to 2 halves x n_inner tiles x TN lanes.  Padded edges
    # carry val = 0 so they contribute nothing regardless of their ids.
    tn = max(128, (tn // 128) * 128)
    n_inner = max(1, _cdiv(_cdiv(n, tn), 2))
    n_pad = 2 * n_inner * tn
    pad_e = n_pad - n
    edge_sentinel = node_sentinel - 1
    src_p = jnp.pad(src_i, (0, pad_e), constant_values=edge_sentinel)
    dst_p = jnp.pad(dst_i, (0, pad_e), constant_values=edge_sentinel)
    val_p = jnp.pad(val, (0, pad_e), constant_values=0.0)

    nodes_col = nodes_p.reshape(k_pad, 1)      # nodes -> sublanes
    src_row = src_p.reshape(1, n_pad)          # edges -> lanes
    dst_row = dst_p.reshape(1, n_pad)
    val_row = val_p.reshape(1, n_pad)

    edge_map = lambda p, i: (0, p * n_inner + i)

    partials = pl.pallas_call(
        _mass_conservation_kernel,
        out_shape=jax.ShapeDtypeStruct((2, 8, 128), jnp.float32),
        grid_spec=pltpu.PrefetchScalarGridSpec(
            num_scalar_prefetch=0,
            grid=(2, n_inner),
            in_specs=[
                pl.BlockSpec((k_pad, 1), lambda p, i: (0, 0)),  # nodes (resident)
                pl.BlockSpec((1, tn), edge_map),                # src ids
                pl.BlockSpec((1, tn), edge_map),                # dst ids
                pl.BlockSpec((1, tn), edge_map),                # flow values
            ],
            out_specs=pl.BlockSpec((1, 8, 128), lambda p, i: (p, 0, 0)),
            scratch_shapes=[pltpu.VMEM((8, tn), jnp.float32)],
        ),
        compiler_params=pltpu.CompilerParams(
            dimension_semantics=("parallel", "arbitrary")),
    )(nodes_col, src_row, dst_row, val_row)

    # Two per-core partial sums -> scalar loss (added in the JAX wrapper).
    return partials[:, 0, 0].sum()


def _reference_loss(flow):
    # Vectorized mirror of the PyTorch dict-scatter loop.
    src = flow[:, 0].astype(jnp.int32)
    dst = flow[:, 1].astype(jnp.int32)
    val = flow[:, 2]
    nodes = jnp.unique(jnp.concatenate([src, dst]))
    per_node = jax.vmap(
        lambda nd: jnp.sum(jnp.where(src == nd, val, 0.0))
        - jnp.sum(jnp.where(dst == nd, val, 0.0)))(nodes)
    return jnp.sum(per_node)


if __name__ == "__main__":
    key = jax.random.PRNGKey(0)
    k_src, k_dst, k_val = jax.random.split(key, 3)

    # Small synthetic graph: 300 edges over node ids in [0, 64).
    n_edges = 300
    src = jax.random.randint(k_src, (n_edges,), 0, 64).astype(jnp.float32)
    dst = jax.random.randint(k_dst, (n_edges,), 0, 64).astype(jnp.float32)
    val = jax.random.normal(k_val, (n_edges,), dtype=jnp.float32)
    flow = jnp.stack([src, dst, val], axis=1)          # (300, 3)

    # tn=128 -> grid (2, 2): exercises padding, accumulation, init/finalize.
    loss = mass_conservation_loss(flow, tn=128)
    jax.block_until_ready(loss)

    ref = _reference_loss(flow)
    assert abs(float(loss) - float(ref)) < 1e-3, (float(loss), float(ref))
    print("KERNEL_OK")
</pallas_src>

<mosaic_0001>
module attributes {stable_mosaic.version = 11 : i64} {
  func.func @_mass_conservation_kernel(%arg0: i32, %arg1: i32, %arg2: memref<64x1xi32, #tpu.memory_space<vmem>>, %arg3: memref<1x128xi32, #tpu.memory_space<vmem>>, %arg4: memref<1x128xi32, #tpu.memory_space<vmem>>, %arg5: memref<1x128xf32, #tpu.memory_space<vmem>>, %arg6: memref<1x8x128xf32, #tpu.memory_space<vmem>>, %arg7: memref<8x128xf32, #tpu.memory_space<vmem>>) attributes {dimension_semantics = [#tpu.dimension_semantics<parallel>, #tpu.dimension_semantics<arbitrary>], iteration_bounds = array<i64: 2, 2>, scalar_prefetch = 0 : i64, scratch_operands = 1 : i64, tpu.core_type = #tpu.core_type<tc>, window_params = [{pipeline_mode = #tpu.pipeline_mode<synchronous>, transform_indices = @transform_0, window_bounds = array<i64: 64, 1>}, {transform_indices = @transform_1, window_bounds = array<i64: 1, 128>}, {transform_indices = @transform_2, window_bounds = array<i64: 1, 128>}, {transform_indices = @transform_3, window_bounds = array<i64: 1, 128>}, {transform_indices = @transform_4, window_bounds = array<i64: 1, 8, 128>}]} {
    %c0_i32 = arith.constant 0 : i32
    %0 = arith.cmpi eq, %arg1, %c0_i32 : i32
    %1 = arith.extui %0 : i1 to i32
    %c0_i32_0 = arith.constant 0 : i32
    %2 = arith.cmpi ne, %1, %c0_i32_0 : i32
    scf.if %2 {
      %cst_35 = arith.constant 0.000000e+00 : f32
      %105 = vector.broadcast %cst_35 : f32 to vector<8x128xf32>
      %c0_36 = arith.constant 0 : index
      %c0_37 = arith.constant 0 : index
      %106 = vector.load %arg7[%c0_36, %c0_37] : memref<8x128xf32, #tpu.memory_space<vmem>>, vector<8x128xf32>
      tpu.vector_store %arg7[%c0_36, %c0_37], %105 {strides = array<i32>} : memref<8x128xf32, #tpu.memory_space<vmem>>, vector<8x128xf32>,
    } else {
    }
    %c0 = arith.constant 0 : index
    %c0_1 = arith.constant 0 : index
    %3 = vector.load %arg3[%c0, %c0_1] : memref<1x128xi32, #tpu.memory_space<vmem>>, vector<1x128xi32>
    %4 = vector.shape_cast %3 : vector<1x128xi32> to vector<1x128xi32>
    %5 = vector.broadcast %4 : vector<1x128xi32> to vector<8x128xi32>
    %c0_2 = arith.constant 0 : index
    %c0_3 = arith.constant 0 : index
    %6 = vector.load %arg4[%c0_2, %c0_3] : memref<1x128xi32, #tpu.memory_space<vmem>>, vector<1x128xi32>
    %7 = vector.shape_cast %6 : vector<1x128xi32> to vector<1x128xi32>
    %8 = vector.broadcast %7 : vector<1x128xi32> to vector<8x128xi32>
    %c0_4 = arith.constant 0 : index
    %c0_5 = arith.constant 0 : index
    %9 = vector.load %arg5[%c0_4, %c0_5] : memref<1x128xf32, #tpu.memory_space<vmem>>, vector<1x128xf32>
    %10 = vector.shape_cast %9 : vector<1x128xf32> to vector<1x128xf32>
    %11 = vector.broadcast %10 : vector<1x128xf32> to vector<8x128xf32>
    %c0_6 = arith.constant 0 : index
    %c0_7 = arith.constant 0 : index
    %12 = vector.load %arg7[%c0_6, %c0_7] : memref<8x128xf32, #tpu.memory_space<vmem>>, vector<8x128xf32>
    %c0_8 = arith.constant 0 : index
    %c0_9 = arith.constant 0 : index
    %13 = vector.load %arg2[%c0_8, %c0_9] : memref<64x1xi32, #tpu.memory_space<vmem>>, vector<8x1xi32>
    %14 = vector.broadcast %13 : vector<8x1xi32> to vector<8x128xi32>
    %15 = arith.cmpi eq, %5, %14 : vector<8x128xi32>
    %cst = arith.constant 0.000000e+00 : f32
    %16 = vector.broadcast %cst : f32 to vector<8x128xf32>
    %17 = arith.select %15, %11, %16 : vector<8x128xi1>, vector<8x128xf32>
    %18 = arith.addf %12, %17 : vector<8x128xf32>
    %19 = vector.broadcast %13 : vector<8x1xi32> to vector<8x128xi32>
    %20 = arith.cmpi eq, %8, %19 : vector<8x128xi32>
    %cst_10 = arith.constant 0.000000e+00 : f32
    %21 = vector.broadcast %cst_10 : f32 to vector<8x128xf32>
    %22 = arith.select %20, %11, %21 : vector<8x128xi1>, vector<8x128xf32>
    %23 = arith.subf %18, %22 : vector<8x128xf32>
    %c8 = arith.constant 8 : index
    %c0_11 = arith.constant 0 : index
    %24 = vector.load %arg2[%c8, %c0_11] : memref<64x1xi32, #tpu.memory_space<vmem>>, vector<8x1xi32>
    %25 = vector.broadcast %24 : vector<8x1xi32> to vector<8x128xi32>
    %26 = arith.cmpi eq, %5, %25 : vector<8x128xi32>
    %cst_12 = arith.constant 0.000000e+00 : f32
    %27 = vector.broadcast %cst_12 : f32 to vector<8x128xf32>
    %28 = arith.select %26, %11, %27 : vector<8x128xi1>, vector<8x128xf32>
    %29 = arith.addf %23, %28 : vector<8x128xf32>
    %30 = vector.broadcast %24 : vector<8x1xi32> to vector<8x128xi32>
    %31 = arith.cmpi eq, %8, %30 : vector<8x128xi32>
    %cst_13 = arith.constant 0.000000e+00 : f32
    %32 = vector.broadcast %cst_13 : f32 to vector<8x128xf32>
    %33 = arith.select %31, %11, %32 : vector<8x128xi1>, vector<8x128xf32>
    %34 = arith.subf %29, %33 : vector<8x128xf32>
    %c16 = arith.constant 16 : index
    %c0_14 = arith.constant 0 : index
    %35 = vector.load %arg2[%c16, %c0_14] : memref<64x1xi32, #tpu.memory_space<vmem>>, vector<8x1xi32>
    %36 = vector.broadcast %35 : vector<8x1xi32> to vector<8x128xi32>
    %37 = arith.cmpi eq, %5, %36 : vector<8x128xi32>
    %cst_15 = arith.constant 0.000000e+00 : f32
    %38 = vector.broadcast %cst_15 : f32 to vector<8x128xf32>
    %39 = arith.select %37, %11, %38 : vector<8x128xi1>, vector<8x128xf32>
    %40 = arith.addf %34, %39 : vector<8x128xf32>
    %41 = vector.broadcast %35 : vector<8x1xi32> to vector<8x128xi32>
    %42 = arith.cmpi eq, %8, %41 : vector<8x128xi32>
    %cst_16 = arith.constant 0.000000e+00 : f32
    %43 = vector.broadcast %cst_16 : f32 to vector<8x128xf32>
    %44 = arith.select %42, %11, %43 : vector<8x128xi1>, vector<8x128xf32>
    %45 = arith.subf %40, %44 : vector<8x128xf32>
    %c24 = arith.constant 24 : index
    %c0_17 = arith.constant 0 : index
    %46 = vector.load %arg2[%c24, %c0_17] : memref<64x1xi32, #tpu.memory_space<vmem>>, vector<8x1xi32>
    %47 = vector.broadcast %46 : vector<8x1xi32> to vector<8x128xi32>
    %48 = arith.cmpi eq, %5, %47 : vector<8x128xi32>
    %cst_18 = arith.constant 0.000000e+00 : f32
    %49 = vector.broadcast %cst_18 : f32 to vector<8x128xf32>
    %50 = arith.select %48, %11, %49 : vector<8x128xi1>, vector<8x128xf32>
    %51 = arith.addf %45, %50 : vector<8x128xf32>
    %52 = vector.broadcast %46 : vector<8x1xi32> to vector<8x128xi32>
    %53 = arith.cmpi eq, %8, %52 : vector<8x128xi32>
    %cst_19 = arith.constant 0.000000e+00 : f32
    %54 = vector.broadcast %cst_19 : f32 to vector<8x128xf32>
    %55 = arith.select %53, %11, %54 : vector<8x128xi1>, vector<8x128xf32>
    %56 = arith.subf %51, %55 : vector<8x128xf32>
    %c32 = arith.constant 32 : index
    %c0_20 = arith.constant 0 : index
    %57 = vector.load %arg2[%c32, %c0_20] : memref<64x1xi32, #tpu.memory_space<vmem>>, vector<8x1xi32>
    %58 = vector.broadcast %57 : vector<8x1xi32> to vector<8x128xi32>
    %59 = arith.cmpi eq, %5, %58 : vector<8x128xi32>
    %cst_21 = arith.constant 0.000000e+00 : f32
    %60 = vector.broadcast %cst_21 : f32 to vector<8x128xf32>
    %61 = arith.select %59, %11, %60 : vector<8x128xi1>, vector<8x128xf32>
    %62 = arith.addf %56, %61 : vector<8x128xf32>
    %63 = vector.broadcast %57 : vector<8x1xi32> to vector<8x128xi32>
    %64 = arith.cmpi eq, %8, %63 : vector<8x128xi32>
    %cst_22 = arith.constant 0.000000e+00 : f32
    %65 = vector.broadcast %cst_22 : f32 to vector<8x128xf32>
    %66 = arith.select %64, %11, %65 : vector<8x128xi1>, vector<8x128xf32>
    %67 = arith.subf %62, %66 : vector<8x128xf32>
    %c40 = arith.constant 40 : index
    %c0_23 = arith.constant 0 : index
    %68 = vector.load %arg2[%c40, %c0_23] : memref<64x1xi32, #tpu.memory_space<vmem>>, vector<8x1xi32>
    %69 = vector.broadcast %68 : vector<8x1xi32> to vector<8x128xi32>
    %70 = arith.cmpi eq, %5, %69 : vector<8x128xi32>
    %cst_24 = arith.constant 0.000000e+00 : f32
    %71 = vector.broadcast %cst_24 : f32 to vector<8x128xf32>
    %72 = arith.select %70, %11, %71 : vector<8x128xi1>, vector<8x128xf32>
    %73 = arith.addf %67, %72 : vector<8x128xf32>
    %74 = vector.broadcast %68 : vector<8x1xi32> to vector<8x128xi32>
    %75 = arith.cmpi eq, %8, %74 : vector<8x128xi32>
    %cst_25 = arith.constant 0.000000e+00 : f32
    %76 = vector.broadcast %cst_25 : f32 to vector<8x128xf32>
    %77 = arith.select %75, %11, %76 : vector<8x128xi1>, vector<8x128xf32>
    %78 = arith.subf %73, %77 : vector<8x128xf32>
    %c48 = arith.constant 48 : index
    %c0_26 = arith.constant 0 : index
    %79 = vector.load %arg2[%c48, %c0_26] : memref<64x1xi32, #tpu.memory_space<vmem>>, vector<8x1xi32>
    %80 = vector.broadcast %79 : vector<8x1xi32> to vector<8x128xi32>
    %81 = arith.cmpi eq, %5, %80 : vector<8x128xi32>
    %cst_27 = arith.constant 0.000000e+00 : f32
    %82 = vector.broadcast %cst_27 : f32 to vector<8x128xf32>
    %83 = arith.select %81, %11, %82 : vector<8x128xi1>, vector<8x128xf32>
    %84 = arith.addf %78, %83 : vector<8x128xf32>
    %85 = vector.broadcast %79 : vector<8x1xi32> to vector<8x128xi32>
    %86 = arith.cmpi eq, %8, %85 : vector<8x128xi32>
    %cst_28 = arith.constant 0.000000e+00 : f32
    %87 = vector.broadcast %cst_28 : f32 to vector<8x128xf32>
    %88 = arith.select %86, %11, %87 : vector<8x128xi1>, vector<8x128xf32>
    %89 = arith.subf %84, %88 : vector<8x128xf32>
    %c56 = arith.constant 56 : index
    %c0_29 = arith.constant 0 : index
    %90 = vector.load %arg2[%c56, %c0_29] : memref<64x1xi32, #tpu.memory_space<vmem>>, vector<8x1xi32>
    %91 = vector.broadcast %90 : vector<8x1xi32> to vector<8x128xi32>
    %92 = arith.cmpi eq, %5, %91 : vector<8x128xi32>
    %cst_30 = arith.constant 0.000000e+00 : f32
    %93 = vector.broadcast %cst_30 : f32 to vector<8x128xf32>
    %94 = arith.select %92, %11, %93 : vector<8x128xi1>, vector<8x128xf32>
    %95 = arith.addf %89, %94 : vector<8x128xf32>
    %96 = vector.broadcast %90 : vector<8x1xi32> to vector<8x128xi32>
    %97 = arith.cmpi eq, %8, %96 : vector<8x128xi32>
    %cst_31 = arith.constant 0.000000e+00 : f32
    %98 = vector.broadcast %cst_31 : f32 to vector<8x128xf32>
    %99 = arith.select %97, %11, %98 : vector<8x128xi1>, vector<8x128xf32>
    %100 = arith.subf %95, %99 : vector<8x128xf32>
    %c0_32 = arith.constant 0 : index
    %c0_33 = arith.constant 0 : index
    %101 = vector.load %arg7[%c0_32, %c0_33] : memref<8x128xf32, #tpu.memory_space<vmem>>, vector<8x128xf32>
    tpu.vector_store %arg7[%c0_32, %c0_33], %100 {strides = array<i32>} : memref<8x128xf32, #tpu.memory_space<vmem>>, vector<8x128xf32>,
    %c1_i32 = arith.constant 1 : i32
    %102 = arith.cmpi eq, %arg1, %c1_i32 : i32
    %103 = arith.extui %102 : i1 to i32
    %c0_i32_34 = arith.constant 0 : i32
    %104 = arith.cmpi ne, %103, %c0_i32_34 : i32
    scf.if %104 {
      %c0_35 = arith.constant 0 : index
      %c0_36 = arith.constant 0 : index
      %105 = vector.load %arg7[%c0_35, %c0_36] : memref<8x128xf32, #tpu.memory_space<vmem>>, vector<8x128xf32>
      %106 = vector.shape_cast %105 : vector<8x128xf32> to vector<1x8x128xf32>
      %cst_37 = arith.constant dense<0.000000e+00> : vector<1xf32>
      %107 = vector.multi_reduction <add>, %106, %cst_37 [1, 2] : vector<1x8x128xf32> to vector<1xf32>
      %108 = vector.shape_cast %107 : vector<1xf32> to vector<1x1x1xf32>
      %109 = vector.extract %108[0, 0, 0] : f32 from vector<1x1x1xf32>
      %110 = vector.broadcast %109 : f32 to vector<1x8x128xf32>
      %c0_38 = arith.constant 0 : index
      %c0_39 = arith.constant 0 : index
      %c0_40 = arith.constant 0 : index
      %111 = vector.load %arg6[%c0_38, %c0_39, %c0_40] : memref<1x8x128xf32, #tpu.memory_space<vmem>>, vector<1x8x128xf32>
      tpu.vector_store %arg6[%c0_38, %c0_39, %c0_40], %110 {strides = array<i32>} : memref<1x8x128xf32, #tpu.memory_space<vmem>>, vector<1x8x128xf32>,
    } else {
    }
    return
  }
  func.func @transform_0(%arg0: i32, %arg1: i32) -> (i32, i32) {
    %c0_i32 = arith.constant 0 : i32
    %c0_i32_0 = arith.constant 0 : i32
    %c0_i32_1 = arith.constant 0 : i32
    return %c0_i32, %c0_i32_0 : i32, i32
  }
  func.func @transform_1(%arg0: i32, %arg1: i32) -> (i32, i32) {
    %c2_i32 = arith.constant 2 : i32
    %0 = arith.muli %arg0, %c2_i32 : i32
    %1 = arith.addi %0, %arg1 : i32
    %c0_i32 = arith.constant 0 : i32
    %c0_i32_0 = arith.constant 0 : i32
    return %c0_i32, %1 : i32, i32
  }
  func.func @transform_2(%arg0: i32, %arg1: i32) -> (i32, i32) {
    %c2_i32 = arith.constant 2 : i32
    %0 = arith.muli %arg0, %c2_i32 : i32
    %1 = arith.addi %0, %arg1 : i32
    %c0_i32 = arith.constant 0 : i32
    %c0_i32_0 = arith.constant 0 : i32
    return %c0_i32, %1 : i32, i32
  }
  func.func @transform_3(%arg0: i32, %arg1: i32) -> (i32, i32) {
    %c2_i32 = arith.constant 2 : i32
    %0 = arith.muli %arg0, %c2_i32 : i32
    %1 = arith.addi %0, %arg1 : i32
    %c0_i32 = arith.constant 0 : i32
    %c0_i32_0 = arith.constant 0 : i32
    return %c0_i32, %1 : i32, i32
  }
  func.func @transform_4(%arg0: i32, %arg1: i32) -> (i32, i32, i32) {
    %c0_i32 = arith.constant 0 : i32
    %c0_i32_0 = arith.constant 0 : i32
    %c0_i32_1 = arith.constant 0 : i32
    return %arg0, %c0_i32, %c0_i32_0 : i32, i32, i32
  }
}

</mosaic_0001>

<llo_original>
// kernel: tpu_custom_call.1
$region0: #{tpu_custom_call.1}
  #allocation0 [shape = 'u32[]', space=smem, size = 0x4, offset = 0x4, fixed_abs, tag = 'smem constant byte address 0x4 - core index']
  #allocation1 [shape = 'u32[144,128]{1,0:T(1,128)}', space=vmem, size = 0x12000, scoped, tag = 'internal scratch']
  #allocation2 [shape = 'f32[8,128]{1,0:T(8,128)}', space=vmem, size = 0x1000, scoped, tag = 'scratch operand']
  %s0 = inlined_call_operand.vmem [shape: s32[64,1], index: 0, kind: input, shape index: {}]
  %s1 = inlined_call_operand.vmem [shape: s32[1,512], index: 1, kind: input, shape index: {}]
  %s2 = inlined_call_operand.vmem [shape: s32[1,512], index: 2, kind: input, shape index: {}]
  %s3 = inlined_call_operand.vmem [shape: f32[1,512], index: 3, kind: input, shape index: {}]
  %s4 = inlined_call_operand.hbm [shape: f32[2,8,128], index: 4, kind: output, shape index: {}]
  %s5 = sld [smem:[#allocation0]]
  $region57: #{tpu_custom_call.1} parent=0
    _
  %s7 = ssub.s32 1, %s5
  %s8 = scalar_select 0, %s7, %s5
  $region1: #{tpu_custom_call.1} parent=0
    #allocation3 [shape = 'u8[8192]{0}', space=vmem, size = 0x2000, scoped, tag = 'output window, operand 0']
    #allocation4 [shape = 's32[2]{0}', space=sflag, size = 0x8, scoped, tag = 'scoped memory for tpu_custom_call.1']
    %9 = vsyncpa [#allocation4], 0
    %s10 = scalar_lea.sflag [#allocation4], 1
    %11 = vsyncpa %s10, 0
    loop: start=0, step=1, limit=6
    $region2: #{tpu_custom_call.1} parent=1 // loop_pre_header
      _
    $region3: #{tpu_custom_call.1} parent=1 // loop_header
      %s13 = sphi 0, %s17
      %p14 = scmp.ge.s32.totalorder %s13, 6
      %s20 = sphi 0, %s32
      %s21 = sphi 0, %s28
      %s22 = sphi 0, %s20
      %s23 = sphi 0, %s21
      %s24 = sphi 0, %s22
      %s25 = sphi 0, %s23
      %s33 = sphi 0, %s33
      %s35 = sphi 0, %s33
      %s36 = sphi 0, %s35
      %s50 = sphi 0, %s36
      %s60 = sphi 0, %s62
      %s63 = sphi 0, %s60
      %s64 = sphi 0, %s63
      %s80 = sphi 0, %s64
      %s90 = sphi 0, %s92
      %s93 = sphi 0, %s90
      %s94 = sphi 0, %s93
      %s110 = sphi 0, %s94
      %s120 = sphi 0, %s122
      %s123 = sphi 0, %s120
      %s124 = sphi 0, %s123
      %s140 = sphi 0, %s124
      %s146 = sphi 0, %s148
      %s149 = sphi 0, %s146
      %s150 = sphi 0, %s149
      %s166 = sphi 0, %s150
    $region4: #{tpu_custom_call.1} parent=1 // loop_header_branch
      %16 = sbr.rel (%p14) target = $region8
    $region5: #{tpu_custom_call.1} parent=1 // loop_body
      %s18 = ssub.s32 %s13, 1
      %s19 = ssub.s32 %s13, 2
      %s26 = sadd.s32 1, %s21
      %p27 = scmp.ge.s32.totalorder %s26, 2
      %s28 = scalar_select %p27, 0, %s26
      %s29 = sadd.s32 1, %s20
      %s30 = scalar_select %p27, %s29, %s20
      %p31 = scmp.ge.s32.totalorder %s30, 2
      %s32 = scalar_select %p31, 0, %s30
      %s34 = sadd.s32 %s33, 1
      %p37 = scmp.eq.s32.totalorder %s13, 3
      %p38 = scmp.ne.s32.totalorder %s33, %s35
      %p39 = scmp.eq.s32.totalorder %s13, 0
      %p40 = por %p38, %p39
      %p41 = scmp.ne.s32.totalorder %s33, %s35
      %p42 = scmp.eq.s32.totalorder %s18, 3
      %p43 = por %p41, %p42
      %p44 = scmp.ne.s32.totalorder %s35, %s36
      %p45 = scmp.eq.s32.totalorder %s18, 0
      %p46 = por %p44, %p45
      %p47 = scmp.ne.s32.totalorder %s35, %s36
      %p48 = scmp.eq.s32.totalorder %s19, 3
      %p49 = por %p47, %p48
      %p51 = scmp.ne.s32.totalorder %s36, %s50
      %p52 = scmp.eq.s32.totalorder %s19, 0
      %p53 = por %p51, %p52
      %s54 = smul.u32 %s20, 2
      %s55 = sadd.s32 %s54, %s21
      %s56 = smul.u32 %s32, 2
      %s57 = sadd.s32 %s56, %s28
      %s58 = ssub.s32 %s55, %s57
      %p59 = scmp.eq.s32.totalorder %s58, 0
      %s61 = sadd.s32 %s60, 1
      %s62 = scalar_select %p59, %s60, %s61
      %p65 = pneg %p59
      %p66 = scmp.eq.s32.totalorder %s13, 3
      %p67 = por %p65, %p66
      %p68 = scmp.ne.s32.totalorder %s60, %s63
      %p69 = scmp.eq.s32.totalorder %s13, 0
      %p70 = por %p68, %p69
      %p71 = scmp.ne.s32.totalorder %s60, %s63
      %p72 = scmp.eq.s32.totalorder %s18, 3
      %p73 = por %p71, %p72
      %p74 = scmp.ne.s32.totalorder %s63, %s64
      %p75 = scmp.eq.s32.totalorder %s18, 0
      %p76 = por %p74, %p75
      %p77 = scmp.ne.s32.totalorder %s63, %s64
      %p78 = scmp.eq.s32.totalorder %s19, 3
      %p79 = por %p77, %p78
      %p81 = scmp.ne.s32.totalorder %s64, %s80
      %p82 = scmp.eq.s32.totalorder %s19, 0
      %p83 = por %p81, %p82
      %s84 = smul.u32 %s20, 2
      %s85 = sadd.s32 %s84, %s21
      %s86 = smul.u32 %s32, 2
      %s87 = sadd.s32 %s86, %s28
      %s88 = ssub.s32 %s85, %s87
      %p89 = scmp.eq.s32.totalorder %s88, 0
      %s91 = sadd.s32 %s90, 1
      %s92 = scalar_select %p89, %s90, %s91
      %p95 = pneg %p89
      %p96 = scmp.eq.s32.totalorder %s13, 3
      %p97 = por %p95, %p96
      %p98 = scmp.ne.s32.totalorder %s90, %s93
      %p99 = scmp.eq.s32.totalorder %s13, 0
      %p100 = por %p98, %p99
      %p101 = scmp.ne.s32.totalorder %s90, %s93
      %p102 = scmp.eq.s32.totalorder %s18, 3
      %p103 = por %p101, %p102
      %p104 = scmp.ne.s32.totalorder %s93, %s94
      %p105 = scmp.eq.s32.totalorder %s18, 0
      %p106 = por %p104, %p105
      %p107 = scmp.ne.s32.totalorder %s93, %s94
      %p108 = scmp.eq.s32.totalorder %s19, 3
      %p109 = por %p107, %p108
      %p111 = scmp.ne.s32.totalorder %s94, %s110
      %p112 = scmp.eq.s32.totalorder %s19, 0
      %p113 = por %p111, %p112
      %s114 = smul.u32 %s20, 2
      %s115 = sadd.s32 %s114, %s21
      %s116 = smul.u32 %s32, 2
      %s117 = sadd.s32 %s116, %s28
      %s118 = ssub.s32 %s115, %s117
      %p119 = scmp.eq.s32.totalorder %s118, 0
      %s121 = sadd.s32 %s120, 1
      %s122 = scalar_select %p119, %s120, %s121
      %p125 = pneg %p119
      %p126 = scmp.eq.s32.totalorder %s13, 3
      %p127 = por %p125, %p126
      %p128 = scmp.ne.s32.totalorder %s120, %s123
      %p129 = scmp.eq.s32.totalorder %s13, 0
      %p130 = por %p128, %p129
      %p131 = scmp.ne.s32.totalorder %s120, %s123
      %p132 = scmp.eq.s32.totalorder %s18, 3
      %p133 = por %p131, %p132
      %p134 = scmp.ne.s32.totalorder %s123, %s124
      %p135 = scmp.eq.s32.totalorder %s18, 0
      %p136 = por %p134, %p135
      %p137 = scmp.ne.s32.totalorder %s123, %s124
      %p138 = scmp.eq.s32.totalorder %s19, 3
      %p139 = por %p137, %p138
      %p141 = scmp.ne.s32.totalorder %s124, %s140
      %p142 = scmp.eq.s32.totalorder %s19, 0
      %p143 = por %p141, %p142
      %s144 = ssub.s32 %s20, %s32
      %p145 = scmp.eq.s32.totalorder %s144, 0
      %s147 = sadd.s32 %s146, 1
      %s148 = scalar_select %p145, %s146, %s147
      %p151 = pneg %p145
      %p152 = scmp.eq.s32.totalorder %s13, 3
      %p153 = por %p151, %p152
      %p154 = scmp.ne.s32.totalorder %s146, %s149
      %p155 = scmp.eq.s32.totalorder %s13, 0
      %p156 = por %p154, %p155
      %p157 = scmp.ne.s32.totalorder %s146, %s149
      %p158 = scmp.eq.s32.totalorder %s18, 3
      %p159 = por %p157, %p158
      %p160 = scmp.ne.s32.totalorder %s149, %s150
      %p161 = scmp.eq.s32.totalorder %s18, 0
      %p162 = por %p160, %p161
      %p163 = scmp.ne.s32.totalorder %s149, %s150
      %p164 = scmp.eq.s32.totalorder %s19, 3
      %p165 = por %p163, %p164
      %p167 = scmp.ne.s32.totalorder %s150, %s166
      %p168 = scmp.eq.s32.totalorder %s19, 0
      %p169 = por %p167, %p168
      %p170 = scmp.le.s32.totalorder 1, %s13
      %p171 = scmp.lt.s32.totalorder %s13, 5
      %p172 = pnand %p170, %p171
      %p173 = pneg %p172
      // Predicated region
      $region9: #{tpu_custom_call.1} parent=5 // pred_check
        _
      $region10: #{tpu_custom_call.1} parent=5 // pred_check_branch
        %175 = sbr.rel (%p172) target = $region12
      $region11: #{tpu_custom_call.1} parent=5 // pred_region
        %s176 = ssub.s32 %s13, 1
        // Predicated region
        $region13: #{tpu_custom_call.1} parent=11 // pred_check
          %p177 = pneg %p46
        $region14: #{tpu_custom_call.1} parent=11 // pred_check_branch
          %179 = sbr.rel (%p177) target = $region16
        $region15: #{tpu_custom_call.1} parent=11 // pred_region
          _
        $region16: #{tpu_custom_call.1} parent=11 // pred_fallthru
          _
      $region12: #{tpu_custom_call.1} parent=5 // pred_fallthru
        _
      %p180 = scmp.lt.s32.totalorder %s13, 4
      // Predicated region
      $region17: #{tpu_custom_call.1} parent=5 // pred_check
        %p181 = pneg %p180
      $region18: #{tpu_custom_call.1} parent=5 // pred_check_branch
        %183 = sbr.rel (%p181) target = $region20
      $region19: #{tpu_custom_call.1} parent=5 // pred_region
        // Predicated region
        $region21: #{tpu_custom_call.1} parent=19 // pred_check
          %p184 = pneg %p70
        $region22: #{tpu_custom_call.1} parent=19 // pred_check_branch
          %186 = sbr.rel (%p184) target = $region24
        $region23: #{tpu_custom_call.1} parent=19 // pred_region
          %s187 = smul.u32 %s20, 2
          %s188 = sadd.s32 %s187, %s21
          %p189 = scmp.lt.s32.totalorder %s188, 3
          %s190 = scalar_select %p189, %s188, 3
          %s191 = scalar_lea.vmem %s1, %s190
          %s192 = smul.u32 %s20, 2
          %s193 = sadd.s32 %s192, %s21
        $region24: #{tpu_custom_call.1} parent=19 // pred_fallthru
          _
        // Predicated region
        $region25: #{tpu_custom_call.1} parent=19 // pred_check
          %p194 = pneg %p100
        $region26: #{tpu_custom_call.1} parent=19 // pred_check_branch
          %196 = sbr.rel (%p194) target = $region28
        $region27: #{tpu_custom_call.1} parent=19 // pred_region
          %s197 = smul.u32 %s20, 2
          %s198 = sadd.s32 %s197, %s21
          %p199 = scmp.lt.s32.totalorder %s198, 3
          %s200 = scalar_select %p199, %s198, 3
          %s201 = scalar_lea.vmem %s2, %s200
          %s202 = smul.u32 %s20, 2
          %s203 = sadd.s32 %s202, %s21
        $region28: #{tpu_custom_call.1} parent=19 // pred_fallthru
          _
        // Predicated region
        $region29: #{tpu_custom_call.1} parent=19 // pred_check
          %p204 = pneg %p130
        $region30: #{tpu_custom_call.1} parent=19 // pred_check_branch
          %206 = sbr.rel (%p204) target = $region32
        $region31: #{tpu_custom_call.1} parent=19 // pred_region
          %s207 = smul.u32 %s20, 2
          %s208 = sadd.s32 %s207, %s21
          %p209 = scmp.lt.s32.totalorder %s208, 3
          %s210 = scalar_select %p209, %s208, 3
          %s211 = scalar_lea.vmem %s3, %s210
          %s212 = smul.u32 %s20, 2
          %s213 = sadd.s32 %s212, %s21
        $region32: #{tpu_custom_call.1} parent=19 // pred_fallthru
          _
      $region20: #{tpu_custom_call.1} parent=5 // pred_fallthru
        _
      %p214 = scmp.le.s32.totalorder 1, %s13
      %p215 = scmp.lt.s32.totalorder %s13, 5
      %p216 = pnand %p214, %p215
      %p217 = pneg %p216
      // Predicated region
      $region33: #{tpu_custom_call.1} parent=5 // pred_check
        _
      $region34: #{tpu_custom_call.1} parent=5 // pred_check_branch
        %219 = sbr.rel (%p216) target = $region36
      $region35: #{tpu_custom_call.1} parent=5 // pred_region
        %s220 = ssub.s32 %s13, 1
        %p221 = pneg %p46
        %p222 = pneg %p43
        %s223 = smul.u32 %s22, 2
        %s224 = sadd.s32 %s223, %s23
        %p225 = scmp.lt.s32.totalorder %s224, 3
        %s226 = scalar_select %p225, %s224, 3
        %s227 = scalar_lea.vmem %s1, %s226
        %p228 = pneg %p76
        %p229 = pneg %p73
        %s230 = smul.u32 %s22, 2
        %s231 = sadd.s32 %s230, %s23
        %p232 = scmp.lt.s32.totalorder %s231, 3
        %s233 = scalar_select %p232, %s231, 3
        %s234 = scalar_lea.vmem %s2, %s233
        %p235 = pneg %p106
        %p236 = pneg %p103
        %s237 = smul.u32 %s22, 2
        %s238 = sadd.s32 %s237, %s23
        %p239 = scmp.lt.s32.totalorder %s238, 3
        %s240 = scalar_select %p239, %s238, 3
        %s241 = scalar_lea.vmem %s3, %s240
        %p242 = pneg %p136
        %p243 = pneg %p133
        %p244 = pneg %p162
        %p245 = pneg %p159
        %s246 = sand.u32 %s149, 1
        %s247 = scalar_lea.sflag [#allocation4], %s246
        %s248 = sand.u32 %s149, 1
        %s249 = smul.addr %s248, 8
        %s250 = scalar_lea.vmem [#allocation3], %s249
        %s251 = smul.u32 %s22, 2
        %s252 = sadd.s32 %s251, %s23
        %p253 = scmp.lt.s32.totalorder %s252, 3
        %s254 = scalar_select %p253, %s252, 3
        %s255 = scalar_lea.vmem %s1, %s254
        %s256 = smul.u32 %s22, 2
        %s257 = sadd.s32 %s256, %s23
        %s258 = smul.u32 %s22, 2
        %s259 = sadd.s32 %s258, %s23
        %p260 = scmp.lt.s32.totalorder %s259, 3
        %s261 = scalar_select %p260, %s259, 3
        %s262 = scalar_lea.vmem %s2, %s261
        %s263 = smul.u32 %s22, 2
        %s264 = sadd.s32 %s263, %s23
        %s265 = smul.u32 %s22, 2
        %s266 = sadd.s32 %s265, %s23
        %p267 = scmp.lt.s32.totalorder %s266, 3
        %s268 = scalar_select %p267, %s266, 3
        %s269 = scalar_lea.vmem %s3, %s268
        %s270 = smul.u32 %s22, 2
        %s271 = sadd.s32 %s270, %s23
        %p272 = scmp.eq.s32.totalorder %s23, 0
        // Predicated region
        $region37: #{tpu_custom_call.1} parent=35 // pred_check
          %p273 = pneg %p272
        $region38: #{tpu_custom_call.1} parent=35 // pred_check_branch
          %275 = sbr.rel (%p273) target = $region40
        $region39: #{tpu_custom_call.1} parent=35 // pred_region
          %276 = vst [vmem:[#allocation2] sm:$0xff] 0.0
        $region40: #{tpu_custom_call.1} parent=35 // pred_fallthru
          _
        %v277 = vld [vmem:[%s255] sm:$0x1]
        %v278 = vlaneseq
        %v279 = vshrl.u32 %v278, 7
        %v280 = vsub.s32 0, %v279
        %v281 = vrot.slane %v277, %v280
        %v282 = vld [vmem:[%s262] sm:$0x1]
        %v283 = vlaneseq
        %v284 = vshrl.u32 %v283, 7
        %v285 = vsub.s32 0, %v284
        %v286 = vrot.slane %v282, %v285
        %v287 = vld [vmem:[%s269] sm:$0x1]
        %v289 = vlaneseq
        %v290 = vshrl.u32 %v289, 7
        %v291 = vsub.s32 0, %v290
        %v292 = vrot.slane %v287, %v291
        %v294 = vld [vmem:[#allocation2] sm:$0xff]
        %v295 = vld [vmem:[%s0] sm:$0xff]
        %296 = vset.pattern.permute.xlu0 0
        %297 = vperm.xlu0 %296, %v295
        %v298 = vpop.permute.xlu0 %297
        %vm299 = vcmp.eq.s32.totalorder %v281, %v298
        %v300 = vsel %vm299, %v292, 0.0
        %v301 = vadd.f32 %v294, %v300
        %vm302 = vcmp.eq.s32.totalorder %v286, %v298
        %v303 = vsel %vm302, %v292, 0.0
        %v304 = vsub.f32 %v301, %v303
        %v305 = vld [vmem:[%s0 + $0x8] sm:$0xff]
        %306 = vset.pattern.permute.xlu0 0
        %307 = vperm.xlu0 %306, %v305
        %v308 = vpop.permute.xlu0 %307
        %vm309 = vcmp.eq.s32.totalorder %v281, %v308
        %v310 = vsel %vm309, %v292, 0.0
        %v311 = vadd.f32 %v304, %v310
        %vm312 = vcmp.eq.s32.totalorder %v286, %v308
        %v313 = vsel %vm312, %v292, 0.0
        %v314 = vsub.f32 %v311, %v313
        %v315 = vld [vmem:[%s0 + $0x10] sm:$0xff]
        %316 = vset.pattern.permute.xlu0 0
        %317 = vperm.xlu0 %316, %v315
        %v318 = vpop.permute.xlu0 %317
        %vm319 = vcmp.eq.s32.totalorder %v281, %v318
        %v320 = vsel %vm319, %v292, 0.0
        %v321 = vadd.f32 %v314, %v320
        %vm322 = vcmp.eq.s32.totalorder %v286, %v318
        %v323 = vsel %vm322, %v292, 0.0
        %v324 = vsub.f32 %v321, %v323
        %v325 = vld [vmem:[%s0 + $0x18] sm:$0xff]
        %326 = vset.pattern.permute.xlu0 0
        %327 = vperm.xlu0 %326, %v325
        %v328 = vpop.permute.xlu0 %327
        %vm329 = vcmp.eq.s32.totalorder %v281, %v328
        %v330 = vsel %vm329, %v292, 0.0
        %v331 = vadd.f32 %v324, %v330
        %vm332 = vcmp.eq.s32.totalorder %v286, %v328
        %v333 = vsel %vm332, %v292, 0.0
        %v334 = vsub.f32 %v331, %v333
        %v335 = vld [vmem:[%s0 + $0x20] sm:$0xff]
        %336 = vset.pattern.permute.xlu0 0
        %337 = vperm.xlu0 %336, %v335
        %v338 = vpop.permute.xlu0 %337
        %vm339 = vcmp.eq.s32.totalorder %v281, %v338
        %v340 = vsel %vm339, %v292, 0.0
        %v341 = vadd.f32 %v334, %v340
        %vm342 = vcmp.eq.s32.totalorder %v286, %v338
        %v343 = vsel %vm342, %v292, 0.0
        %v344 = vsub.f32 %v341, %v343
        %v345 = vld [vmem:[%s0 + $0x28] sm:$0xff]
        %346 = vset.pattern.permute.xlu0 0
        %347 = vperm.xlu0 %346, %v345
        %v348 = vpop.permute.xlu0 %347
        %vm349 = vcmp.eq.s32.totalorder %v281, %v348
        %v350 = vsel %vm349, %v292, 0.0
        %v351 = vadd.f32 %v344, %v350
        %vm352 = vcmp.eq.s32.totalorder %v286, %v348
        %v353 = vsel %vm352, %v292, 0.0
        %v354 = vsub.f32 %v351, %v353
        %v355 = vld [vmem:[%s0 + $0x30] sm:$0xff]
        %356 = vset.pattern.permute.xlu0 0
        %357 = vperm.xlu0 %356, %v355
        %v358 = vpop.permute.xlu0 %357
        %vm359 = vcmp.eq.s32.totalorder %v281, %v358
        %v360 = vsel %vm359, %v292, 0.0
        %v361 = vadd.f32 %v354, %v360
        %vm362 = vcmp.eq.s32.totalorder %v286, %v358
        %v363 = vsel %vm362, %v292, 0.0
        %v364 = vsub.f32 %v361, %v363
        %v365 = vld [vmem:[%s0 + $0x38] sm:$0xff]
        %366 = vset.pattern.permute.xlu0 0
        %367 = vperm.xlu0 %366, %v365
        %v368 = vpop.permute.xlu0 %367
        %vm369 = vcmp.eq.s32.totalorder %v281, %v368
        %v370 = vsel %vm369, %v292, 0.0
        %v371 = vadd.f32 %v364, %v370
        %vm372 = vcmp.eq.s32.totalorder %v286, %v368
        %v373 = vsel %vm372, %v292, 0.0
        %v374 = vsub.f32 %v371, %v373
        %375 = vst [vmem:[#allocation2] sm:$0xff] %v374
        %p376 = scmp.eq.s32.totalorder %s23, 1
        // Predicated region
        $region41: #{tpu_custom_call.1} parent=35 // pred_check
          %p377 = pneg %p376
        $region42: #{tpu_custom_call.1} parent=35 // pred_check_branch
          %379 = sbr.rel (%p377) target = $region44
        $region43: #{tpu_custom_call.1} parent=35 // pred_region
          %v380 = vld [vmem:[#allocation2] sm:$0xff]
          %381 = vadd.xlane.f32.xlu0 %v380
          %v382 = vpop.xlane.xlu0 %381
          %v383 = vrot.slane %v382, 4
          %v384 = vadd.f32 %v382, %v383
          %v385 = vrot.slane %v384, 2
          %v386 = vadd.f32 %v384, %v385
          %v387 = vrot.slane %v386, 1
          %v388 = vadd.f32 %v386, %v387
          %s389 = vtos %v388
          %v390 = vstv %s389
          %391 = vst [vmem:[%s250] sm:$0xff] %v390
        $region44: #{tpu_custom_call.1} parent=35 // pred_fallthru
          _
        %s392 = sand.u32 %s149, 1
        %s393 = scalar_lea.sflag [#allocation4], %s392
        %s394 = sand.u32 %s149, 1
        %s395 = smul.addr %s394, 8
        %s396 = scalar_lea.vmem [#allocation3], %s395
        // Predicated region
        $region45: #{tpu_custom_call.1} parent=35 // pred_check
          %p397 = pneg %p159
        $region46: #{tpu_custom_call.1} parent=35 // pred_check_branch
          %399 = sbr.rel (%p397) target = $region48
        $region47: #{tpu_custom_call.1} parent=35 // pred_region
          %s401 = ssub.s32 128, 128
          %402 = vsyncadd %s393, %s401
          %s403 = smul.addr %s22, 128
          %s404 = scalar_lea.hbm %s4, %s403
          %s406 = sshll.u32 %s396, 4
          %s407 = int_to_ptr.vmem [resolvable:$true] %s406
          %409 = dma.vmem_to_hbm [thread:$0]  %s407, 128, %s404, %s393
        $region48: #{tpu_custom_call.1} parent=35 // pred_fallthru
          _
      $region36: #{tpu_custom_call.1} parent=5 // pred_fallthru
        _
      %p410 = scmp.le.s32.totalorder 2, %s13
      // Predicated region
      $region49: #{tpu_custom_call.1} parent=5 // pred_check
        %p411 = pneg %p410
      $region50: #{tpu_custom_call.1} parent=5 // pred_check_branch
        %413 = sbr.rel (%p411) target = $region52
      $region51: #{tpu_custom_call.1} parent=5 // pred_region
        %s414 = ssub.s32 %s13, 2
        // Predicated region
        $region53: #{tpu_custom_call.1} parent=51 // pred_check
          %p415 = pneg %p165
        $region54: #{tpu_custom_call.1} parent=51 // pred_check_branch
          %417 = sbr.rel (%p415) target = $region56
        $region55: #{tpu_custom_call.1} parent=51 // pred_region
          %s418 = sand.u32 %s150, 1
          %s419 = scalar_lea.sflag [#allocation4], %s418
          %s420 = sand.u32 %s150, 1
          %s421 = smul.addr %s420, 8
          %s422 = scalar_lea.vmem [#allocation3], %s421
          %423 = dma.done %s419, 128
        $region56: #{tpu_custom_call.1} parent=51 // pred_fallthru
          _
      $region52: #{tpu_custom_call.1} parent=5 // pred_fallthru
        _
    $region6: #{tpu_custom_call.1} parent=1 // loop_footer
      %s17 = sadd.s32 1, %s13
    $region7: #{tpu_custom_call.1} parent=1 // loop_footer_branch
      %12 = sbr.rel target = $region3
    $region8: #{tpu_custom_call.1} parent=1 // loop_exit
      _
    %424 = vsyncpa [#allocation4], 1
    %s425 = scalar_lea.sflag [#allocation4], 1
    %426 = vsyncpa %s425, 1

</llo_original>
